<compile_context>
chip_gen: v6e
topology: v6e:2x2x1
jax: 0.10.0
libtpu: 0.0.40
codegen_flags: <defaults>
</compile_context>

<pallas_src>
import functools

import jax
import jax.numpy as jnp
from jax import lax
from jax.experimental import pallas as pl
from jax.experimental.pallas import tpu as pltpu


# ----------------------------------------------------------------------------
# Pallas kernel: whole recurrence runs in one invocation.
# ----------------------------------------------------------------------------
def _rnn_lfr_kernel(u_ref, wscal_ref, w1_ref, b1_ref, w2_ref, y_ref, *,
                    seq_len, x_size, lanes, nonlinearity, static_unroll,
                    loop_unroll):
    xs = x_size
    shape = (1, lanes)
    f32 = jnp.float32

    # ---- hoisted lane-stacked MLP weights: one (1, lanes) row each -----------
    W1 = w1_ref[...]
    B1 = b1_ref[...]
    W2 = w2_ref[...]          # zero-padded beyond k*hidden

    # ---- hoisted scalar weights, splat ONCE into lane-broadcast vregs --------
    def bcast(i):
        return jnp.full(shape, wscal_ref[i], dtype=f32)

    idx = 0
    cz = [bcast(idx + i) for i in range(xs)]; idx += xs          # Cz column
    cy = [bcast(idx + i) for i in range(xs)]; idx += xs          # Cy column
    dyw = bcast(idx); idx += 1                                   # Dyw
    a = [[bcast(idx + i * xs + j) for j in range(xs)]            # A[i, j] (in,out)
         for i in range(xs)]; idx += xs * xs
    bw = [bcast(idx + j) for j in range(xs)]; idx += xs          # Bw row
    b2sum = bcast(idx); idx += 1                                 # sum(b2[:k])
    dzu = bcast(idx); idx += 1                                   # Dzu
    dyu = bcast(idx); idx += 1                                   # Dyu
    bu = [bcast(idx + j) for j in range(xs)]; idx += xs          # Bu row

    lane_iota = lax.broadcasted_iota(jnp.int32, shape, 1)
    zero = jnp.zeros(shape, f32)

    if nonlinearity == "relu":
        act = lambda v: jnp.maximum(v, 0.0)                      # VPU
    else:  # "sigmoid": exp + approximate reciprocal, both on the EUP slot
        act = lambda v: pl.reciprocal(jnp.exp(-v) + 1.0, approx=True)

    def step(t, lane_pos, x, y_acc):
        # u-dependent terms: one SMEM scalar load + one splat; independent of
        # the recurrence so the scheduler can hoist them off the critical path.
        u_v = jnp.full(shape, u_ref[t], dtype=f32)

        # z = Cz(x) + Dzu(u)                 -- lane-uniform vector FMAs
        z = u_v * dzu
        for i in range(xs):
            z = z + x[i] * cz[i]

        # w = sum_i fc2_i(act(fc1_i(z)))     -- lane-stacked branches;
        # keepdims reduce + broadcasting add keep w resident in a vreg
        # (no vector->scalar extract on the critical path).
        h = act(z * W1 + B1)
        w = jnp.sum(h * W2, axis=-1, keepdims=True) + b2sum      # (1,1)->(1,lanes)

        # y = Cy(x) + Dyu(u) + Dyw(w)        -- deposited into lane `lane_pos`
        y = u_v * dyu + w * dyw
        for i in range(xs):
            y = y + x[i] * cy[i]
        y_acc = jnp.where(lane_iota == lane_pos, y, y_acc)

        # x_{t+1} = A(x) + Bu(u) + Bw(w)     -- vector FMAs
        x_new = []
        for j in range(xs):
            v = u_v * bu[j] + w * bw[j]
            for i in range(xs):
                v = v + x[i] * a[i][j]
            x_new.append(v)
        return tuple(x_new), y_acc

    rows = (seq_len + lanes - 1) // lanes
    x = tuple(zero for _ in range(xs))
    for row in range(rows):                       # rows is small & static
        base = row * lanes
        row_len = min(lanes, seq_len - base)
        y_acc = zero
        if static_unroll:
            for i in range(row_len):              # full static unroll
                x, y_acc = step(base + i, i, x, y_acc)
        else:
            def body(i, carry, base=base):
                xc = carry[:xs]
                xn, ya = step(base + i, i, xc, carry[xs])
                return (*xn, ya)
            carry = lax.fori_loop(0, row_len, body, (*x, y_acc),
                                  unroll=max(1, min(loop_unroll, row_len)))
            x = carry[:xs]                        # carry explicitly bound/used
            y_acc = carry[xs]
        # Lane-dense (1, lanes) store, static row index, once per `lanes` steps.
        y_ref[row:row + 1, :] = y_acc


# ----------------------------------------------------------------------------
# Wrapper: jitted end-to-end so weight packing fuses with the pallas_call.
# ----------------------------------------------------------------------------
@functools.partial(jax.jit,
                   static_argnames=("num_used_layers", "nonlinearity",
                                    "force_loop"))
def hierarchical_rnn_lfr_forward(u_seq, params, num_used_layers=None,
                                 nonlinearity="relu", force_loop=False):
    if nonlinearity not in ("relu", "sigmoid"):
        raise ValueError(f"unsupported nonlinearity: {nonlinearity!r}")

    u_seq = jnp.asarray(u_seq, jnp.float32).reshape(-1)   # == input.reshape(1,-1)
    n = int(u_seq.shape[0])

    num_layer = params["W1"].shape[0]
    k = num_layer if num_used_layers is None else int(num_used_layers)
    assert 1 <= k <= num_layer
    x_size = params["A"].shape[0]
    hidden = params["W1"].shape[2]

    # Vector-broadcast path assumes the module defaults u=y=w=z=1.
    assert params["Bu"].shape[0] == 1   # u_size == 1
    assert params["Cz"].shape[1] == 1   # z_size == 1
    assert params["Cy"].shape[1] == 1   # y_size == 1
    assert params["Bw"].shape[0] == 1   # w_size == 1

    # -- lane-stack the first k MLP branches, zero-pad to a multiple of 128 ----
    kh = k * hidden
    lanes = max(128, ((kh + 127) // 128) * 128)
    pad = lanes - kh
    W1s = jnp.pad(params["W1"][:k].reshape(kh), (0, pad)
                  ).reshape(1, lanes).astype(jnp.float32)
    b1s = jnp.pad(params["b1"][:k].reshape(kh), (0, pad)
                  ).reshape(1, lanes).astype(jnp.float32)
    W2s = jnp.pad(params["W2"][:k, :, 0].reshape(kh), (0, pad)   # pad MUST be 0
                  ).reshape(1, lanes).astype(jnp.float32)

    # -- flat scalar-weight table (read from SMEM once, splat to vregs) --------
    wscal = jnp.concatenate([
        params["Cz"][:, 0],                          # x_size
        params["Cy"][:, 0],                          # x_size
        params["Dyw"].reshape(1),                    # 1
        params["A"].reshape(-1),                     # x_size^2, (in,out) layout
        params["Bw"][0, :],                          # x_size
        jnp.sum(params["b2"][:k, 0]).reshape(1),     # 1
        params["Dzu"].reshape(1),                    # 1
        params["Dyu"].reshape(1),                    # 1
        params["Bu"][0, :],                          # x_size
    ]).astype(jnp.float32)

    static_unroll = (not force_loop) and n <= 256
    rows = (n + lanes - 1) // lanes

    kernel = functools.partial(
        _rnn_lfr_kernel, seq_len=n, x_size=x_size, lanes=lanes,
        nonlinearity=nonlinearity, static_unroll=static_unroll, loop_unroll=16)

    smem = pl.BlockSpec(memory_space=pltpu.MemorySpace.SMEM)
    vmem = pl.BlockSpec(memory_space=pltpu.MemorySpace.VMEM)
    y2d = pl.pallas_call(
        kernel,
        out_shape=jax.ShapeDtypeStruct((rows, lanes), jnp.float32),
        in_specs=[smem, smem, vmem, vmem, vmem],
        out_specs=vmem,
    )(u_seq, wscal, W1s, b1s, W2s)
    return y2d.reshape(-1)[:n]          # torch.stack of per-step scalars -> (N,)


# ----------------------------------------------------------------------------
# Deterministic parameter construction (shapes dictated by the module __init__).
# Weights stored pre-transposed as (in_features, out_features).
# ----------------------------------------------------------------------------
def init_params(key, hidden_size, num_layer, x_size=2, u_size=1, y_size=1,
                w_size=1, z_size=1):
    ks = jax.random.split(key, 13)

    def lin(k, fan_in, fan_out):
        bound = 1.0 / jnp.sqrt(jnp.float32(fan_in))
        return jax.random.uniform(k, (fan_in, fan_out), jnp.float32, -bound, bound)

    params = dict(
        A=lin(ks[0], x_size, x_size),
        Bu=lin(ks[1], u_size, x_size),
        Bw=lin(ks[2], w_size, x_size),
        Cy=lin(ks[3], x_size, y_size),
        Dyu=lin(ks[4], u_size, y_size),
        Dyw=lin(ks[5], w_size, y_size),
        Cz=lin(ks[6], x_size, z_size),
        Dzu=lin(ks[7], u_size, z_size),
        Dzw=lin(ks[8], w_size, z_size),   # present in the module, unused in forward
    )
    b1_bound = 1.0 / jnp.sqrt(jnp.float32(z_size))
    b2_bound = 1.0 / jnp.sqrt(jnp.float32(hidden_size))
    params.update(
        W1=jax.random.uniform(ks[9], (num_layer, z_size, hidden_size),
                              jnp.float32, -b1_bound, b1_bound),
        b1=jax.random.uniform(ks[10], (num_layer, hidden_size),
                              jnp.float32, -b1_bound, b1_bound),
        W2=jax.random.uniform(ks[11], (num_layer, hidden_size, w_size),
                              jnp.float32, -b2_bound, b2_bound),
        b2=jax.random.uniform(ks[12], (num_layer, w_size),
                              jnp.float32, -b2_bound, b2_bound),
    )
    return params


# ----------------------------------------------------------------------------
# Pure-JAX reference (mirrors the PyTorch forward) for correctness checking.
# ----------------------------------------------------------------------------
def reference_forward(u_seq, params, num_used_layers=None, nonlinearity="relu"):
    u_seq = jnp.asarray(u_seq, jnp.float32).reshape(-1)
    n = u_seq.shape[0]
    num_layer = params["W1"].shape[0]
    k = num_layer if num_used_layers is None else int(num_used_layers)
    act = (lambda v: jnp.maximum(v, 0.0)) if nonlinearity == "relu" else jax.nn.sigmoid

    x = jnp.zeros((1, params["A"].shape[0]), jnp.float32)
    ys = []
    for t in range(n):
        u = u_seq[t].reshape(1, 1)
        z = x @ params["Cz"] + u @ params["Dzu"]
        w = jnp.zeros((1, params["W2"].shape[2]), jnp.float32)
        for i in range(k):
            h = act(z @ params["W1"][i] + params["b1"][i])
            w = w + h @ params["W2"][i] + params["b2"][i]
        y = x @ params["Cy"] + u @ params["Dyu"] + w @ params["Dyw"]
        x = x @ params["A"] + u @ params["Bu"] + w @ params["Bw"]
        ys.append(y.reshape(()))
    return jnp.stack(ys)


if __name__ == "__main__":
    hidden_size, num_layer, seq_len = 32, 3, 8

    key = jax.random.PRNGKey(0)
    k_in, k_par = jax.random.split(key)
    u = jax.random.normal(k_in, (seq_len,), jnp.float32)      # input sequence (N,)
    params = init_params(k_par, hidden_size, num_layer)

    # default: all branches used (static-unroll path)
    y = jax.block_until_ready(hierarchical_rnn_lfr_forward(u, params))
    y_ref = reference_forward(u, params)
    assert y.shape == (seq_len,)
    assert jnp.allclose(y, y_ref, atol=1e-5, rtol=1e-5), (y, y_ref)

    # partial hierarchy: only first 2 branches
    y2 = jax.block_until_ready(
        hierarchical_rnn_lfr_forward(u, params, num_used_layers=2))
    y2_ref = reference_forward(u, params, num_used_layers=2)
    assert jnp.allclose(y2, y2_ref, atol=1e-5, rtol=1e-5), (y2, y2_ref)

    # exercise the fori_loop path on the same (small, stable) sequence
    y3 = jax.block_until_ready(
        hierarchical_rnn_lfr_forward(u, params, force_loop=True))
    assert jnp.allclose(y3, y_ref, atol=1e-5, rtol=1e-5), (y3, y_ref)

    # sigmoid path: EUP approximate reciprocal -> looser tolerance
    y4 = jax.block_until_ready(
        hierarchical_rnn_lfr_forward(u, params, nonlinearity="sigmoid"))
    y4_ref = reference_forward(u, params, nonlinearity="sigmoid")
    assert jnp.allclose(y4, y4_ref, atol=1e-2, rtol=1e-2), (y4, y4_ref)

    print("KERNEL_OK")
</pallas_src>

<mosaic_0001>
module attributes {stable_mosaic.version = 11 : i64} {
  func.func @_rnn_lfr_kernel(%arg0: memref<8xf32, #tpu.memory_space<smem>>, %arg1: memref<16xf32, #tpu.memory_space<smem>>, %arg2: memref<1x128xf32, #tpu.memory_space<vmem>>, %arg3: memref<1x128xf32, #tpu.memory_space<vmem>>, %arg4: memref<1x128xf32, #tpu.memory_space<vmem>>, %arg5: memref<1x128xf32, #tpu.memory_space<vmem>>) attributes {dimension_semantics = [], scalar_prefetch = 0 : i64, scratch_operands = 0 : i64, tpu.core_type = #tpu.core_type<tc>} {
    %c0 = arith.constant 0 : index
    %c0_0 = arith.constant 0 : index
    %0 = vector.load %arg2[%c0, %c0_0] : memref<1x128xf32, #tpu.memory_space<vmem>>, vector<1x128xf32>
    %c0_1 = arith.constant 0 : index
    %c0_2 = arith.constant 0 : index
    %1 = vector.load %arg3[%c0_1, %c0_2] : memref<1x128xf32, #tpu.memory_space<vmem>>, vector<1x128xf32>
    %c0_3 = arith.constant 0 : index
    %c0_4 = arith.constant 0 : index
    %2 = vector.load %arg4[%c0_3, %c0_4] : memref<1x128xf32, #tpu.memory_space<vmem>>, vector<1x128xf32>
    %c0_5 = arith.constant 0 : index
    %3 = memref.load %arg1[%c0_5] : memref<16xf32, #tpu.memory_space<smem>>
    %4 = vector.broadcast %3 : f32 to vector<1x128xf32>
    %c1 = arith.constant 1 : index
    %5 = memref.load %arg1[%c1] : memref<16xf32, #tpu.memory_space<smem>>
    %6 = vector.broadcast %5 : f32 to vector<1x128xf32>
    %c2 = arith.constant 2 : index
    %7 = memref.load %arg1[%c2] : memref<16xf32, #tpu.memory_space<smem>>
    %8 = vector.broadcast %7 : f32 to vector<1x128xf32>
    %c3 = arith.constant 3 : index
    %9 = memref.load %arg1[%c3] : memref<16xf32, #tpu.memory_space<smem>>
    %10 = vector.broadcast %9 : f32 to vector<1x128xf32>
    %c4 = arith.constant 4 : index
    %11 = memref.load %arg1[%c4] : memref<16xf32, #tpu.memory_space<smem>>
    %12 = vector.broadcast %11 : f32 to vector<1x128xf32>
    %c5 = arith.constant 5 : index
    %13 = memref.load %arg1[%c5] : memref<16xf32, #tpu.memory_space<smem>>
    %14 = vector.broadcast %13 : f32 to vector<1x128xf32>
    %c6 = arith.constant 6 : index
    %15 = memref.load %arg1[%c6] : memref<16xf32, #tpu.memory_space<smem>>
    %16 = vector.broadcast %15 : f32 to vector<1x128xf32>
    %c7 = arith.constant 7 : index
    %17 = memref.load %arg1[%c7] : memref<16xf32, #tpu.memory_space<smem>>
    %18 = vector.broadcast %17 : f32 to vector<1x128xf32>
    %c8 = arith.constant 8 : index
    %19 = memref.load %arg1[%c8] : memref<16xf32, #tpu.memory_space<smem>>
    %20 = vector.broadcast %19 : f32 to vector<1x128xf32>
    %c9 = arith.constant 9 : index
    %21 = memref.load %arg1[%c9] : memref<16xf32, #tpu.memory_space<smem>>
    %22 = vector.broadcast %21 : f32 to vector<1x128xf32>
    %c10 = arith.constant 10 : index
    %23 = memref.load %arg1[%c10] : memref<16xf32, #tpu.memory_space<smem>>
    %24 = vector.broadcast %23 : f32 to vector<1x128xf32>
    %c11 = arith.constant 11 : index
    %25 = memref.load %arg1[%c11] : memref<16xf32, #tpu.memory_space<smem>>
    %26 = vector.broadcast %25 : f32 to vector<1x128xf32>
    %c12 = arith.constant 12 : index
    %27 = memref.load %arg1[%c12] : memref<16xf32, #tpu.memory_space<smem>>
    %28 = vector.broadcast %27 : f32 to vector<1x128xf32>
    %c13 = arith.constant 13 : index
    %29 = memref.load %arg1[%c13] : memref<16xf32, #tpu.memory_space<smem>>
    %30 = vector.broadcast %29 : f32 to vector<1x128xf32>
    %c14 = arith.constant 14 : index
    %31 = memref.load %arg1[%c14] : memref<16xf32, #tpu.memory_space<smem>>
    %32 = vector.broadcast %31 : f32 to vector<1x128xf32>
    %c15 = arith.constant 15 : index
    %33 = memref.load %arg1[%c15] : memref<16xf32, #tpu.memory_space<smem>>
    %34 = vector.broadcast %33 : f32 to vector<1x128xf32>
    %35 = tpu.iota {dimensions = array<i32: 1>} : vector<1x128xi32>
    %cst = arith.constant 0.000000e+00 : f32
    %36 = vector.broadcast %cst : f32 to vector<1x128xf32>
    %c0_6 = arith.constant 0 : index
    %37 = memref.load %arg0[%c0_6] : memref<8xf32, #tpu.memory_space<smem>>
    %38 = vector.broadcast %37 : f32 to vector<1x128xf32>
    %39 = arith.mulf %38, %28 : vector<1x128xf32>
    %40 = arith.mulf %36, %4 : vector<1x128xf32>
    %41 = arith.addf %39, %40 : vector<1x128xf32>
    %42 = arith.mulf %36, %6 : vector<1x128xf32>
    %43 = arith.addf %41, %42 : vector<1x128xf32>
    %44 = arith.mulf %43, %0 : vector<1x128xf32>
    %45 = arith.addf %44, %1 : vector<1x128xf32>
    %cst_7 = arith.constant 0.000000e+00 : f32
    %46 = vector.broadcast %cst_7 : f32 to vector<1x128xf32>
    %47 = arith.maximumf %45, %46 : vector<1x128xf32>
    %48 = arith.mulf %47, %2 : vector<1x128xf32>
    %cst_8 = arith.constant dense<0.000000e+00> : vector<1xf32>
    %49 = vector.multi_reduction <add>, %48, %cst_8 [1] : vector<1x128xf32> to vector<1xf32>
    %50 = vector.shape_cast %49 : vector<1xf32> to vector<1x1xf32>
    %51 = vector.broadcast %50 : vector<1x1xf32> to vector<1x128xf32>
    %52 = arith.addf %51, %26 : vector<1x128xf32>
    %53 = arith.mulf %38, %30 : vector<1x128xf32>
    %54 = arith.mulf %52, %12 : vector<1x128xf32>
    %55 = arith.addf %53, %54 : vector<1x128xf32>
    %56 = arith.mulf %36, %8 : vector<1x128xf32>
    %57 = arith.addf %55, %56 : vector<1x128xf32>
    %58 = arith.mulf %36, %10 : vector<1x128xf32>
    %59 = arith.addf %57, %58 : vector<1x128xf32>
    %c0_i32 = arith.constant 0 : i32
    %60 = vector.broadcast %c0_i32 : i32 to vector<1x128xi32>
    %61 = arith.cmpi eq, %35, %60 : vector<1x128xi32>
    %62 = arith.select %61, %59, %36 : vector<1x128xi1>, vector<1x128xf32>
    %63 = arith.mulf %38, %32 : vector<1x128xf32>
    %64 = arith.mulf %52, %22 : vector<1x128xf32>
    %65 = arith.addf %63, %64 : vector<1x128xf32>
    %66 = arith.mulf %36, %14 : vector<1x128xf32>
    %67 = arith.addf %65, %66 : vector<1x128xf32>
    %68 = arith.mulf %36, %18 : vector<1x128xf32>
    %69 = arith.addf %67, %68 : vector<1x128xf32>
    %70 = arith.mulf %38, %34 : vector<1x128xf32>
    %71 = arith.mulf %52, %24 : vector<1x128xf32>
    %72 = arith.addf %70, %71 : vector<1x128xf32>
    %73 = arith.mulf %36, %16 : vector<1x128xf32>
    %74 = arith.addf %72, %73 : vector<1x128xf32>
    %75 = arith.mulf %36, %20 : vector<1x128xf32>
    %76 = arith.addf %74, %75 : vector<1x128xf32>
    %c1_9 = arith.constant 1 : index
    %77 = memref.load %arg0[%c1_9] : memref<8xf32, #tpu.memory_space<smem>>
    %78 = vector.broadcast %77 : f32 to vector<1x128xf32>
    %79 = arith.mulf %78, %28 : vector<1x128xf32>
    %80 = arith.mulf %69, %4 : vector<1x128xf32>
    %81 = arith.addf %79, %80 : vector<1x128xf32>
    %82 = arith.mulf %76, %6 : vector<1x128xf32>
    %83 = arith.addf %81, %82 : vector<1x128xf32>
    %84 = arith.mulf %83, %0 : vector<1x128xf32>
    %85 = arith.addf %84, %1 : vector<1x128xf32>
    %cst_10 = arith.constant 0.000000e+00 : f32
    %86 = vector.broadcast %cst_10 : f32 to vector<1x128xf32>
    %87 = arith.maximumf %85, %86 : vector<1x128xf32>
    %88 = arith.mulf %87, %2 : vector<1x128xf32>
    %cst_11 = arith.constant dense<0.000000e+00> : vector<1xf32>
    %89 = vector.multi_reduction <add>, %88, %cst_11 [1] : vector<1x128xf32> to vector<1xf32>
    %90 = vector.shape_cast %89 : vector<1xf32> to vector<1x1xf32>
    %91 = vector.broadcast %90 : vector<1x1xf32> to vector<1x128xf32>
    %92 = arith.addf %91, %26 : vector<1x128xf32>
    %93 = arith.mulf %78, %30 : vector<1x128xf32>
    %94 = arith.mulf %92, %12 : vector<1x128xf32>
    %95 = arith.addf %93, %94 : vector<1x128xf32>
    %96 = arith.mulf %69, %8 : vector<1x128xf32>
    %97 = arith.addf %95, %96 : vector<1x128xf32>
    %98 = arith.mulf %76, %10 : vector<1x128xf32>
    %99 = arith.addf %97, %98 : vector<1x128xf32>
    %c1_i32 = arith.constant 1 : i32
    %100 = vector.broadcast %c1_i32 : i32 to vector<1x128xi32>
    %101 = arith.cmpi eq, %35, %100 : vector<1x128xi32>
    %102 = arith.select %101, %99, %62 : vector<1x128xi1>, vector<1x128xf32>
    %103 = arith.mulf %78, %32 : vector<1x128xf32>
    %104 = arith.mulf %92, %22 : vector<1x128xf32>
    %105 = arith.addf %103, %104 : vector<1x128xf32>
    %106 = arith.mulf %69, %14 : vector<1x128xf32>
    %107 = arith.addf %105, %106 : vector<1x128xf32>
    %108 = arith.mulf %76, %18 : vector<1x128xf32>
    %109 = arith.addf %107, %108 : vector<1x128xf32>
    %110 = arith.mulf %78, %34 : vector<1x128xf32>
    %111 = arith.mulf %92, %24 : vector<1x128xf32>
    %112 = arith.addf %110, %111 : vector<1x128xf32>
    %113 = arith.mulf %69, %16 : vector<1x128xf32>
    %114 = arith.addf %112, %113 : vector<1x128xf32>
    %115 = arith.mulf %76, %20 : vector<1x128xf32>
    %116 = arith.addf %114, %115 : vector<1x128xf32>
    %c2_12 = arith.constant 2 : index
    %117 = memref.load %arg0[%c2_12] : memref<8xf32, #tpu.memory_space<smem>>
    %118 = vector.broadcast %117 : f32 to vector<1x128xf32>
    %119 = arith.mulf %118, %28 : vector<1x128xf32>
    %120 = arith.mulf %109, %4 : vector<1x128xf32>
    %121 = arith.addf %119, %120 : vector<1x128xf32>
    %122 = arith.mulf %116, %6 : vector<1x128xf32>
    %123 = arith.addf %121, %122 : vector<1x128xf32>
    %124 = arith.mulf %123, %0 : vector<1x128xf32>
    %125 = arith.addf %124, %1 : vector<1x128xf32>
    %cst_13 = arith.constant 0.000000e+00 : f32
    %126 = vector.broadcast %cst_13 : f32 to vector<1x128xf32>
    %127 = arith.maximumf %125, %126 : vector<1x128xf32>
    %128 = arith.mulf %127, %2 : vector<1x128xf32>
    %cst_14 = arith.constant dense<0.000000e+00> : vector<1xf32>
    %129 = vector.multi_reduction <add>, %128, %cst_14 [1] : vector<1x128xf32> to vector<1xf32>
    %130 = vector.shape_cast %129 : vector<1xf32> to vector<1x1xf32>
    %131 = vector.broadcast %130 : vector<1x1xf32> to vector<1x128xf32>
    %132 = arith.addf %131, %26 : vector<1x128xf32>
    %133 = arith.mulf %118, %30 : vector<1x128xf32>
    %134 = arith.mulf %132, %12 : vector<1x128xf32>
    %135 = arith.addf %133, %134 : vector<1x128xf32>
    %136 = arith.mulf %109, %8 : vector<1x128xf32>
    %137 = arith.addf %135, %136 : vector<1x128xf32>
    %138 = arith.mulf %116, %10 : vector<1x128xf32>
    %139 = arith.addf %137, %138 : vector<1x128xf32>
    %c2_i32 = arith.constant 2 : i32
    %140 = vector.broadcast %c2_i32 : i32 to vector<1x128xi32>
    %141 = arith.cmpi eq, %35, %140 : vector<1x128xi32>
    %142 = arith.select %141, %139, %102 : vector<1x128xi1>, vector<1x128xf32>
    %143 = arith.mulf %118, %32 : vector<1x128xf32>
    %144 = arith.mulf %132, %22 : vector<1x128xf32>
    %145 = arith.addf %143, %144 : vector<1x128xf32>
    %146 = arith.mulf %109, %14 : vector<1x128xf32>
    %147 = arith.addf %145, %146 : vector<1x128xf32>
    %148 = arith.mulf %116, %18 : vector<1x128xf32>
    %149 = arith.addf %147, %148 : vector<1x128xf32>
    %150 = arith.mulf %118, %34 : vector<1x128xf32>
    %151 = arith.mulf %132, %24 : vector<1x128xf32>
    %152 = arith.addf %150, %151 : vector<1x128xf32>
    %153 = arith.mulf %109, %16 : vector<1x128xf32>
    %154 = arith.addf %152, %153 : vector<1x128xf32>
    %155 = arith.mulf %116, %20 : vector<1x128xf32>
    %156 = arith.addf %154, %155 : vector<1x128xf32>
    %c3_15 = arith.constant 3 : index
    %157 = memref.load %arg0[%c3_15] : memref<8xf32, #tpu.memory_space<smem>>
    %158 = vector.broadcast %157 : f32 to vector<1x128xf32>
    %159 = arith.mulf %158, %28 : vector<1x128xf32>
    %160 = arith.mulf %149, %4 : vector<1x128xf32>
    %161 = arith.addf %159, %160 : vector<1x128xf32>
    %162 = arith.mulf %156, %6 : vector<1x128xf32>
    %163 = arith.addf %161, %162 : vector<1x128xf32>
    %164 = arith.mulf %163, %0 : vector<1x128xf32>
    %165 = arith.addf %164, %1 : vector<1x128xf32>
    %cst_16 = arith.constant 0.000000e+00 : f32
    %166 = vector.broadcast %cst_16 : f32 to vector<1x128xf32>
    %167 = arith.maximumf %165, %166 : vector<1x128xf32>
    %168 = arith.mulf %167, %2 : vector<1x128xf32>
    %cst_17 = arith.constant dense<0.000000e+00> : vector<1xf32>
    %169 = vector.multi_reduction <add>, %168, %cst_17 [1] : vector<1x128xf32> to vector<1xf32>
    %170 = vector.shape_cast %169 : vector<1xf32> to vector<1x1xf32>
    %171 = vector.broadcast %170 : vector<1x1xf32> to vector<1x128xf32>
    %172 = arith.addf %171, %26 : vector<1x128xf32>
    %173 = arith.mulf %158, %30 : vector<1x128xf32>
    %174 = arith.mulf %172, %12 : vector<1x128xf32>
    %175 = arith.addf %173, %174 : vector<1x128xf32>
    %176 = arith.mulf %149, %8 : vector<1x128xf32>
    %177 = arith.addf %175, %176 : vector<1x128xf32>
    %178 = arith.mulf %156, %10 : vector<1x128xf32>
    %179 = arith.addf %177, %178 : vector<1x128xf32>
    %c3_i32 = arith.constant 3 : i32
    %180 = vector.broadcast %c3_i32 : i32 to vector<1x128xi32>
    %181 = arith.cmpi eq, %35, %180 : vector<1x128xi32>
    %182 = arith.select %181, %179, %142 : vector<1x128xi1>, vector<1x128xf32>
    %183 = arith.mulf %158, %32 : vector<1x128xf32>
    %184 = arith.mulf %172, %22 : vector<1x128xf32>
    %185 = arith.addf %183, %184 : vector<1x128xf32>
    %186 = arith.mulf %149, %14 : vector<1x128xf32>
    %187 = arith.addf %185, %186 : vector<1x128xf32>
    %188 = arith.mulf %156, %18 : vector<1x128xf32>
    %189 = arith.addf %187, %188 : vector<1x128xf32>
    %190 = arith.mulf %158, %34 : vector<1x128xf32>
    %191 = arith.mulf %172, %24 : vector<1x128xf32>
    %192 = arith.addf %190, %191 : vector<1x128xf32>
    %193 = arith.mulf %149, %16 : vector<1x128xf32>
    %194 = arith.addf %192, %193 : vector<1x128xf32>
    %195 = arith.mulf %156, %20 : vector<1x128xf32>
    %196 = arith.addf %194, %195 : vector<1x128xf32>
    %c4_18 = arith.constant 4 : index
    %197 = memref.load %arg0[%c4_18] : memref<8xf32, #tpu.memory_space<smem>>
    %198 = vector.broadcast %197 : f32 to vector<1x128xf32>
    %199 = arith.mulf %198, %28 : vector<1x128xf32>
    %200 = arith.mulf %189, %4 : vector<1x128xf32>
    %201 = arith.addf %199, %200 : vector<1x128xf32>
    %202 = arith.mulf %196, %6 : vector<1x128xf32>
    %203 = arith.addf %201, %202 : vector<1x128xf32>
    %204 = arith.mulf %203, %0 : vector<1x128xf32>
    %205 = arith.addf %204, %1 : vector<1x128xf32>
    %cst_19 = arith.constant 0.000000e+00 : f32
    %206 = vector.broadcast %cst_19 : f32 to vector<1x128xf32>
    %207 = arith.maximumf %205, %206 : vector<1x128xf32>
    %208 = arith.mulf %207, %2 : vector<1x128xf32>
    %cst_20 = arith.constant dense<0.000000e+00> : vector<1xf32>
    %209 = vector.multi_reduction <add>, %208, %cst_20 [1] : vector<1x128xf32> to vector<1xf32>
    %210 = vector.shape_cast %209 : vector<1xf32> to vector<1x1xf32>
    %211 = vector.broadcast %210 : vector<1x1xf32> to vector<1x128xf32>
    %212 = arith.addf %211, %26 : vector<1x128xf32>
    %213 = arith.mulf %198, %30 : vector<1x128xf32>
    %214 = arith.mulf %212, %12 : vector<1x128xf32>
    %215 = arith.addf %213, %214 : vector<1x128xf32>
    %216 = arith.mulf %189, %8 : vector<1x128xf32>
    %217 = arith.addf %215, %216 : vector<1x128xf32>
    %218 = arith.mulf %196, %10 : vector<1x128xf32>
    %219 = arith.addf %217, %218 : vector<1x128xf32>
    %c4_i32 = arith.constant 4 : i32
    %220 = vector.broadcast %c4_i32 : i32 to vector<1x128xi32>
    %221 = arith.cmpi eq, %35, %220 : vector<1x128xi32>
    %222 = arith.select %221, %219, %182 : vector<1x128xi1>, vector<1x128xf32>
    %223 = arith.mulf %198, %32 : vector<1x128xf32>
    %224 = arith.mulf %212, %22 : vector<1x128xf32>
    %225 = arith.addf %223, %224 : vector<1x128xf32>
    %226 = arith.mulf %189, %14 : vector<1x128xf32>
    %227 = arith.addf %225, %226 : vector<1x128xf32>
    %228 = arith.mulf %196, %18 : vector<1x128xf32>
    %229 = arith.addf %227, %228 : vector<1x128xf32>
    %230 = arith.mulf %198, %34 : vector<1x128xf32>
    %231 = arith.mulf %212, %24 : vector<1x128xf32>
    %232 = arith.addf %230, %231 : vector<1x128xf32>
    %233 = arith.mulf %189, %16 : vector<1x128xf32>
    %234 = arith.addf %232, %233 : vector<1x128xf32>
    %235 = arith.mulf %196, %20 : vector<1x128xf32>
    %236 = arith.addf %234, %235 : vector<1x128xf32>
    %c5_21 = arith.constant 5 : index
    %237 = memref.load %arg0[%c5_21] : memref<8xf32, #tpu.memory_space<smem>>
    %238 = vector.broadcast %237 : f32 to vector<1x128xf32>
    %239 = arith.mulf %238, %28 : vector<1x128xf32>
    %240 = arith.mulf %229, %4 : vector<1x128xf32>
    %241 = arith.addf %239, %240 : vector<1x128xf32>
    %242 = arith.mulf %236, %6 : vector<1x128xf32>
    %243 = arith.addf %241, %242 : vector<1x128xf32>
    %244 = arith.mulf %243, %0 : vector<1x128xf32>
    %245 = arith.addf %244, %1 : vector<1x128xf32>
    %cst_22 = arith.constant 0.000000e+00 : f32
    %246 = vector.broadcast %cst_22 : f32 to vector<1x128xf32>
    %247 = arith.maximumf %245, %246 : vector<1x128xf32>
    %248 = arith.mulf %247, %2 : vector<1x128xf32>
    %cst_23 = arith.constant dense<0.000000e+00> : vector<1xf32>
    %249 = vector.multi_reduction <add>, %248, %cst_23 [1] : vector<1x128xf32> to vector<1xf32>
    %250 = vector.shape_cast %249 : vector<1xf32> to vector<1x1xf32>
    %251 = vector.broadcast %250 : vector<1x1xf32> to vector<1x128xf32>
    %252 = arith.addf %251, %26 : vector<1x128xf32>
    %253 = arith.mulf %238, %30 : vector<1x128xf32>
    %254 = arith.mulf %252, %12 : vector<1x128xf32>
    %255 = arith.addf %253, %254 : vector<1x128xf32>
    %256 = arith.mulf %229, %8 : vector<1x128xf32>
    %257 = arith.addf %255, %256 : vector<1x128xf32>
    %258 = arith.mulf %236, %10 : vector<1x128xf32>
    %259 = arith.addf %257, %258 : vector<1x128xf32>
    %c5_i32 = arith.constant 5 : i32
    %260 = vector.broadcast %c5_i32 : i32 to vector<1x128xi32>
    %261 = arith.cmpi eq, %35, %260 : vector<1x128xi32>
    %262 = arith.select %261, %259, %222 : vector<1x128xi1>, vector<1x128xf32>
    %263 = arith.mulf %238, %32 : vector<1x128xf32>
    %264 = arith.mulf %252, %22 : vector<1x128xf32>
    %265 = arith.addf %263, %264 : vector<1x128xf32>
    %266 = arith.mulf %229, %14 : vector<1x128xf32>
    %267 = arith.addf %265, %266 : vector<1x128xf32>
    %268 = arith.mulf %236, %18 : vector<1x128xf32>
    %269 = arith.addf %267, %268 : vector<1x128xf32>
    %270 = arith.mulf %238, %34 : vector<1x128xf32>
    %271 = arith.mulf %252, %24 : vector<1x128xf32>
    %272 = arith.addf %270, %271 : vector<1x128xf32>
    %273 = arith.mulf %229, %16 : vector<1x128xf32>
    %274 = arith.addf %272, %273 : vector<1x128xf32>
    %275 = arith.mulf %236, %20 : vector<1x128xf32>
    %276 = arith.addf %274, %275 : vector<1x128xf32>
    %c6_24 = arith.constant 6 : index
    %277 = memref.load %arg0[%c6_24] : memref<8xf32, #tpu.memory_space<smem>>
    %278 = vector.broadcast %277 : f32 to vector<1x128xf32>
    %279 = arith.mulf %278, %28 : vector<1x128xf32>
    %280 = arith.mulf %269, %4 : vector<1x128xf32>
    %281 = arith.addf %279, %280 : vector<1x128xf32>
    %282 = arith.mulf %276, %6 : vector<1x128xf32>
    %283 = arith.addf %281, %282 : vector<1x128xf32>
    %284 = arith.mulf %283, %0 : vector<1x128xf32>
    %285 = arith.addf %284, %1 : vector<1x128xf32>
    %cst_25 = arith.constant 0.000000e+00 : f32
    %286 = vector.broadcast %cst_25 : f32 to vector<1x128xf32>
    %287 = arith.maximumf %285, %286 : vector<1x128xf32>
    %288 = arith.mulf %287, %2 : vector<1x128xf32>
    %cst_26 = arith.constant dense<0.000000e+00> : vector<1xf32>
    %289 = vector.multi_reduction <add>, %288, %cst_26 [1] : vector<1x128xf32> to vector<1xf32>
    %290 = vector.shape_cast %289 : vector<1xf32> to vector<1x1xf32>
    %291 = vector.broadcast %290 : vector<1x1xf32> to vector<1x128xf32>
    %292 = arith.addf %291, %26 : vector<1x128xf32>
    %293 = arith.mulf %278, %30 : vector<1x128xf32>
    %294 = arith.mulf %292, %12 : vector<1x128xf32>
    %295 = arith.addf %293, %294 : vector<1x128xf32>
    %296 = arith.mulf %269, %8 : vector<1x128xf32>
    %297 = arith.addf %295, %296 : vector<1x128xf32>
    %298 = arith.mulf %276, %10 : vector<1x128xf32>
    %299 = arith.addf %297, %298 : vector<1x128xf32>
    %c6_i32 = arith.constant 6 : i32
    %300 = vector.broadcast %c6_i32 : i32 to vector<1x128xi32>
    %301 = arith.cmpi eq, %35, %300 : vector<1x128xi32>
    %302 = arith.select %301, %299, %262 : vector<1x128xi1>, vector<1x128xf32>
    %303 = arith.mulf %278, %32 : vector<1x128xf32>
    %304 = arith.mulf %292, %22 : vector<1x128xf32>
    %305 = arith.addf %303, %304 : vector<1x128xf32>
    %306 = arith.mulf %269, %14 : vector<1x128xf32>
    %307 = arith.addf %305, %306 : vector<1x128xf32>
    %308 = arith.mulf %276, %18 : vector<1x128xf32>
    %309 = arith.addf %307, %308 : vector<1x128xf32>
    %310 = arith.mulf %278, %34 : vector<1x128xf32>
    %311 = arith.mulf %292, %24 : vector<1x128xf32>
    %312 = arith.addf %310, %311 : vector<1x128xf32>
    %313 = arith.mulf %269, %16 : vector<1x128xf32>
    %314 = arith.addf %312, %313 : vector<1x128xf32>
    %315 = arith.mulf %276, %20 : vector<1x128xf32>
    %316 = arith.addf %314, %315 : vector<1x128xf32>
    %c7_27 = arith.constant 7 : index
    %317 = memref.load %arg0[%c7_27] : memref<8xf32, #tpu.memory_space<smem>>
    %318 = vector.broadcast %317 : f32 to vector<1x128xf32>
    %319 = arith.mulf %318, %28 : vector<1x128xf32>
    %320 = arith.mulf %309, %4 : vector<1x128xf32>
    %321 = arith.addf %319, %320 : vector<1x128xf32>
    %322 = arith.mulf %316, %6 : vector<1x128xf32>
    %323 = arith.addf %321, %322 : vector<1x128xf32>
    %324 = arith.mulf %323, %0 : vector<1x128xf32>
    %325 = arith.addf %324, %1 : vector<1x128xf32>
    %cst_28 = arith.constant 0.000000e+00 : f32
    %326 = vector.broadcast %cst_28 : f32 to vector<1x128xf32>
    %327 = arith.maximumf %325, %326 : vector<1x128xf32>
    %328 = arith.mulf %327, %2 : vector<1x128xf32>
    %cst_29 = arith.constant dense<0.000000e+00> : vector<1xf32>
    %329 = vector.multi_reduction <add>, %328, %cst_29 [1] : vector<1x128xf32> to vector<1xf32>
    %330 = vector.shape_cast %329 : vector<1xf32> to vector<1x1xf32>
    %331 = vector.broadcast %330 : vector<1x1xf32> to vector<1x128xf32>
    %332 = arith.addf %331, %26 : vector<1x128xf32>
    %333 = arith.mulf %318, %30 : vector<1x128xf32>
    %334 = arith.mulf %332, %12 : vector<1x128xf32>
    %335 = arith.addf %333, %334 : vector<1x128xf32>
    %336 = arith.mulf %309, %8 : vector<1x128xf32>
    %337 = arith.addf %335, %336 : vector<1x128xf32>
    %338 = arith.mulf %316, %10 : vector<1x128xf32>
    %339 = arith.addf %337, %338 : vector<1x128xf32>
    %c7_i32 = arith.constant 7 : i32
    %340 = vector.broadcast %c7_i32 : i32 to vector<1x128xi32>
    %341 = arith.cmpi eq, %35, %340 : vector<1x128xi32>
    %342 = arith.select %341, %339, %302 : vector<1x128xi1>, vector<1x128xf32>
    %c0_30 = arith.constant 0 : index
    %c0_31 = arith.constant 0 : index
    %343 = vector.load %arg5[%c0_30, %c0_31] : memref<1x128xf32, #tpu.memory_space<vmem>>, vector<1x128xf32>
    tpu.vector_store %arg5[%c0_30, %c0_31], %342 {strides = array<i32>} : memref<1x128xf32, #tpu.memory_space<vmem>>, vector<1x128xf32>,
    return
  }
}

</mosaic_0001>

<llo_original>
// kernel: hierarchical_rnn_lfr_forward.1
$region0: #{hierarchical_rnn_lfr_forward.1}
  #allocation0 [shape = 'u32[]', space=smem, size = 0x4, offset = 0x4, fixed_abs, tag = 'smem constant byte address 0x4 - core index']
  #allocation1 [shape = 'u32[144,128]{1,0:T(1,128)}', space=vmem, size = 0x12000, scoped, tag = 'internal scratch']
  %s0 = inlined_call_operand.vmem [shape: f32[8], index: 0, kind: input, shape index: {}]
  %s1 = inlined_call_operand.vmem [shape: f32[16], index: 1, kind: input, shape index: {}]
  %s2 = inlined_call_operand.vmem [shape: f32[1,128], index: 2, kind: input, shape index: {}]
  %s3 = inlined_call_operand.vmem [shape: f32[1,128], index: 3, kind: input, shape index: {}]
  %s4 = inlined_call_operand.vmem [shape: f32[1,128], index: 4, kind: input, shape index: {}]
  %s5 = inlined_call_operand.vmem [shape: f32[1,128], index: 5, kind: output, shape index: {}]
  %s6 = sld [smem:[#allocation0]]
  $region38: #{hierarchical_rnn_lfr_forward.1} parent=0
    _
  %s8 = ssub.s32 1, %s6
  %s9 = scalar_select 0, %s8, %s6
  $region1: #{hierarchical_rnn_lfr_forward.1} parent=0
    #allocation2 [shape = 'u8[512]{0}', space=smem, size = 0x200, scoped, tag = 'input window, operand 0, single buffered']
    #allocation3 [shape = 's32[1]{0}', space=sflag, size = 0x4, scoped, tag = 'scoped memory for hierarchical_rnn_lfr_forward.1']
    #allocation4 [shape = 'u8[512]{0}', space=smem, size = 0x200, scoped, tag = 'input window, operand 1, single buffered']
    #allocation5 [shape = 's32[1]{0}', space=sflag, size = 0x4, scoped, tag = 'scoped memory for hierarchical_rnn_lfr_forward.1']
    %10 = vsyncpa [#allocation3], 0
    %11 = vsyncpa [#allocation5], 0
    // Predicated region
    $region2: #{hierarchical_rnn_lfr_forward.1} parent=1 // pred_check
      _
    $region3: #{hierarchical_rnn_lfr_forward.1} parent=1 // pred_check_branch
      %13 = sbr.rel (0) target = $region5
    $region4: #{hierarchical_rnn_lfr_forward.1} parent=1 // pred_region
      %s15 = ssub.s32 16, 16
      %16 = vsyncadd [#allocation3], %s15
      %s18 = sshll.u32 %s0, 4
      %s19 = int_to_ptr.vmem [resolvable:$true] %s18
      %21 = dma.vmem_to_smem %s19, 16, [#allocation2], [#allocation3]
    $region5: #{hierarchical_rnn_lfr_forward.1} parent=1 // pred_fallthru
      _
    // Predicated region
    $region6: #{hierarchical_rnn_lfr_forward.1} parent=1 // pred_check
      _
    $region7: #{hierarchical_rnn_lfr_forward.1} parent=1 // pred_check_branch
      %23 = sbr.rel (0) target = $region9
    $region8: #{hierarchical_rnn_lfr_forward.1} parent=1 // pred_region
      %s25 = ssub.s32 16, 16
      %26 = vsyncadd [#allocation5], %s25
      %s28 = sshll.u32 %s1, 4
      %s29 = int_to_ptr.vmem [resolvable:$true] %s28
      %31 = dma.vmem_to_smem %s29, 16, [#allocation4], [#allocation5]
    $region9: #{hierarchical_rnn_lfr_forward.1} parent=1 // pred_fallthru
      _
    // Predicated region
    $region10: #{hierarchical_rnn_lfr_forward.1} parent=1 // pred_check
      _
    $region11: #{hierarchical_rnn_lfr_forward.1} parent=1 // pred_check_branch
      %33 = sbr.rel (0) target = $region13
    $region12: #{hierarchical_rnn_lfr_forward.1} parent=1 // pred_region
      _
    $region13: #{hierarchical_rnn_lfr_forward.1} parent=1 // pred_fallthru
      _
    // Predicated region
    $region14: #{hierarchical_rnn_lfr_forward.1} parent=1 // pred_check
      _
    $region15: #{hierarchical_rnn_lfr_forward.1} parent=1 // pred_check_branch
      %35 = sbr.rel (0) target = $region17
    $region16: #{hierarchical_rnn_lfr_forward.1} parent=1 // pred_region
      _
    $region17: #{hierarchical_rnn_lfr_forward.1} parent=1 // pred_fallthru
      _
    // Predicated region
    $region18: #{hierarchical_rnn_lfr_forward.1} parent=1 // pred_check
      _
    $region19: #{hierarchical_rnn_lfr_forward.1} parent=1 // pred_check_branch
      %37 = sbr.rel (0) target = $region21
    $region20: #{hierarchical_rnn_lfr_forward.1} parent=1 // pred_region
      _
    $region21: #{hierarchical_rnn_lfr_forward.1} parent=1 // pred_fallthru
      _
    // Predicated region
    $region22: #{hierarchical_rnn_lfr_forward.1} parent=1 // pred_check
      _
    $region23: #{hierarchical_rnn_lfr_forward.1} parent=1 // pred_check_branch
      %39 = sbr.rel (0) target = $region25
    $region24: #{hierarchical_rnn_lfr_forward.1} parent=1 // pred_region
      %40 = dma.done [#allocation3], 16
    $region25: #{hierarchical_rnn_lfr_forward.1} parent=1 // pred_fallthru
      _
    // Predicated region
    $region26: #{hierarchical_rnn_lfr_forward.1} parent=1 // pred_check
      _
    $region27: #{hierarchical_rnn_lfr_forward.1} parent=1 // pred_check_branch
      %42 = sbr.rel (0) target = $region29
    $region28: #{hierarchical_rnn_lfr_forward.1} parent=1 // pred_region
      %43 = dma.done [#allocation5], 16
    $region29: #{hierarchical_rnn_lfr_forward.1} parent=1 // pred_fallthru
      _
    %44 = sfence
    %v45 = vld [vmem:[%s2] sm:$0x1]
    %v46 = vld [vmem:[%s3] sm:$0x1]
    %v47 = vld [vmem:[%s4] sm:$0x1]
    %s48 = sld [smem:[#allocation4]]
    %v49 = vstv %s48
    %s50 = sld [smem:[#allocation4 + $0x1]]
    %v51 = vstv %s50
    %s52 = sld [smem:[#allocation4 + $0x2]]
    %v53 = vstv %s52
    %s54 = sld [smem:[#allocation4 + $0x3]]
    %v55 = vstv %s54
    %s56 = sld [smem:[#allocation4 + $0x4]]
    %v57 = vstv %s56
    %s58 = sld [smem:[#allocation4 + $0x5]]
    %v59 = vstv %s58
    %s60 = sld [smem:[#allocation4 + $0x6]]
    %v61 = vstv %s60
    %s62 = sld [smem:[#allocation4 + $0x7]]
    %v63 = vstv %s62
    %s64 = sld [smem:[#allocation4 + $0x8]]
    %v65 = vstv %s64
    %s66 = sld [smem:[#allocation4 + $0x9]]
    %v67 = vstv %s66
    %s68 = sld [smem:[#allocation4 + $0xa]]
    %v69 = vstv %s68
    %s70 = sld [smem:[#allocation4 + $0xb]]
    %v71 = vstv %s70
    %s72 = sld [smem:[#allocation4 + $0xc]]
    %v73 = vstv %s72
    %s74 = sld [smem:[#allocation4 + $0xd]]
    %v75 = vstv %s74
    %s76 = sld [smem:[#allocation4 + $0xe]]
    %v77 = vstv %s76
    %s78 = sld [smem:[#allocation4 + $0xf]]
    %v79 = vstv %s78
    %v80 = vlaneseq
    %v81 = vand.u32 %v80, 127
    %s82 = sld [smem:[#allocation2]]
    %v83 = vstv %s82
    %v84 = vmul.f32 %v83, %v73
    %v85 = vmul.f32 %v49, 0.0
    %v86 = vadd.f32 %v84, %v85
    %v87 = vmul.f32 %v51, 0.0
    %v88 = vadd.f32 %v86, %v87
    %v89 = vmul.f32 %v88, %v45
    %v90 = vadd.f32 %v89, %v46
    %v91 = vmax.f32 %v90, 0.0
    %v92 = vmul.f32 %v91, %v47
    %vm93 = vcmask 1040384
    %v94 = vsel %vm93, %v92, 0.0
    %95 = vadd.xlane.f32.xlu0 %v94
    %v96 = vpop.xlane.xlu0 %95
    %v97 = vadd.f32 %v96, %v71
    %v98 = vmul.f32 %v83, %v75
    %v99 = vmul.f32 %v97, %v57
    %v100 = vadd.f32 %v98, %v99
    %v101 = vmul.f32 %v53, 0.0
    %v102 = vadd.f32 %v100, %v101
    %v103 = vmul.f32 %v55, 0.0
    %v104 = vadd.f32 %v102, %v103
    %vm105 = vcmp.eq.s32.totalorder %v81, 0
    %v106 = vsel %vm105, %v104, 0.0
    %v107 = vmul.f32 %v83, %v77
    %v108 = vmul.f32 %v97, %v67
    %v109 = vadd.f32 %v107, %v108
    %v110 = vmul.f32 %v59, 0.0
    %v111 = vadd.f32 %v109, %v110
    %v112 = vmul.f32 %v63, 0.0
    %v113 = vadd.f32 %v111, %v112
    %v114 = vmul.f32 %v83, %v79
    %v115 = vmul.f32 %v97, %v69
    %v116 = vadd.f32 %v114, %v115
    %v117 = vmul.f32 %v61, 0.0
    %v118 = vadd.f32 %v116, %v117
    %v119 = vmul.f32 %v65, 0.0
    %v120 = vadd.f32 %v118, %v119
    %s121 = sld [smem:[#allocation2 + $0x1]]
    %v122 = vstv %s121
    %v123 = vmul.f32 %v122, %v73
    %v124 = vmul.f32 %v113, %v49
    %v125 = vadd.f32 %v123, %v124
    %v126 = vmul.f32 %v120, %v51
    %v127 = vadd.f32 %v125, %v126
    %v128 = vmul.f32 %v127, %v45
    %v129 = vadd.f32 %v128, %v46
    %v130 = vmax.f32 %v129, 0.0
    %v131 = vmul.f32 %v130, %v47
    %v132 = vsel %vm93, %v131, 0.0
    %133 = vadd.xlane.f32.xlu0 %v132
    %v134 = vpop.xlane.xlu0 %133
    %v135 = vadd.f32 %v134, %v71
    %v136 = vmul.f32 %v122, %v75
    %v137 = vmul.f32 %v135, %v57
    %v138 = vadd.f32 %v136, %v137
    %v139 = vmul.f32 %v113, %v53
    %v140 = vadd.f32 %v138, %v139
    %v141 = vmul.f32 %v120, %v55
    %v142 = vadd.f32 %v140, %v141
    %vm143 = vcmp.eq.s32.totalorder %v81, 1
    %v144 = vsel %vm143, %v142, %v106
    %v145 = vmul.f32 %v122, %v77
    %v146 = vmul.f32 %v135, %v67
    %v147 = vadd.f32 %v145, %v146
    %v148 = vmul.f32 %v113, %v59
    %v149 = vadd.f32 %v147, %v148
    %v150 = vmul.f32 %v120, %v63
    %v151 = vadd.f32 %v149, %v150
    %v152 = vmul.f32 %v122, %v79
    %v153 = vmul.f32 %v135, %v69
    %v154 = vadd.f32 %v152, %v153
    %v155 = vmul.f32 %v113, %v61
    %v156 = vadd.f32 %v154, %v155
    %v157 = vmul.f32 %v120, %v65
    %v158 = vadd.f32 %v156, %v157
    %s159 = sld [smem:[#allocation2 + $0x2]]
    %v160 = vstv %s159
    %v161 = vmul.f32 %v160, %v73
    %v162 = vmul.f32 %v151, %v49
    %v163 = vadd.f32 %v161, %v162
    %v164 = vmul.f32 %v158, %v51
    %v165 = vadd.f32 %v163, %v164
    %v166 = vmul.f32 %v165, %v45
    %v167 = vadd.f32 %v166, %v46
    %v168 = vmax.f32 %v167, 0.0
    %v169 = vmul.f32 %v168, %v47
    %v170 = vsel %vm93, %v169, 0.0
    %171 = vadd.xlane.f32.xlu0 %v170
    %v172 = vpop.xlane.xlu0 %171
    %v173 = vadd.f32 %v172, %v71
    %v174 = vmul.f32 %v160, %v75
    %v175 = vmul.f32 %v173, %v57
    %v176 = vadd.f32 %v174, %v175
    %v177 = vmul.f32 %v151, %v53
    %v178 = vadd.f32 %v176, %v177
    %v179 = vmul.f32 %v158, %v55
    %v180 = vadd.f32 %v178, %v179
    %vm181 = vcmp.eq.s32.totalorder %v81, 2
    %v182 = vsel %vm181, %v180, %v144
    %v183 = vmul.f32 %v160, %v77
    %v184 = vmul.f32 %v173, %v67
    %v185 = vadd.f32 %v183, %v184
    %v186 = vmul.f32 %v151, %v59
    %v187 = vadd.f32 %v185, %v186
    %v188 = vmul.f32 %v158, %v63
    %v189 = vadd.f32 %v187, %v188
    %v190 = vmul.f32 %v160, %v79
    %v191 = vmul.f32 %v173, %v69
    %v192 = vadd.f32 %v190, %v191
    %v193 = vmul.f32 %v151, %v61
    %v194 = vadd.f32 %v192, %v193
    %v195 = vmul.f32 %v158, %v65
    %v196 = vadd.f32 %v194, %v195
    %s197 = sld [smem:[#allocation2 + $0x3]]
    %v198 = vstv %s197
    %v199 = vmul.f32 %v198, %v73
    %v200 = vmul.f32 %v189, %v49
    %v201 = vadd.f32 %v199, %v200
    %v202 = vmul.f32 %v196, %v51
    %v203 = vadd.f32 %v201, %v202
    %v204 = vmul.f32 %v203, %v45
    %v205 = vadd.f32 %v204, %v46
    %v206 = vmax.f32 %v205, 0.0
    %v207 = vmul.f32 %v206, %v47
    %v208 = vsel %vm93, %v207, 0.0
    %209 = vadd.xlane.f32.xlu0 %v208
    %v210 = vpop.xlane.xlu0 %209
    %v211 = vadd.f32 %v210, %v71
    %v212 = vmul.f32 %v198, %v75
    %v213 = vmul.f32 %v211, %v57
    %v214 = vadd.f32 %v212, %v213
    %v215 = vmul.f32 %v189, %v53
    %v216 = vadd.f32 %v214, %v215
    %v217 = vmul.f32 %v196, %v55
    %v218 = vadd.f32 %v216, %v217
    %vm219 = vcmp.eq.s32.totalorder %v81, 3
    %v220 = vsel %vm219, %v218, %v182
    %v221 = vmul.f32 %v198, %v77
    %v222 = vmul.f32 %v211, %v67
    %v223 = vadd.f32 %v221, %v222
    %v224 = vmul.f32 %v189, %v59
    %v225 = vadd.f32 %v223, %v224
    %v226 = vmul.f32 %v196, %v63
    %v227 = vadd.f32 %v225, %v226
    %v228 = vmul.f32 %v198, %v79
    %v229 = vmul.f32 %v211, %v69
    %v230 = vadd.f32 %v228, %v229
    %v231 = vmul.f32 %v189, %v61
    %v232 = vadd.f32 %v230, %v231
    %v233 = vmul.f32 %v196, %v65
    %v234 = vadd.f32 %v232, %v233
    %s235 = sld [smem:[#allocation2 + $0x4]]
    %v236 = vstv %s235
    %v237 = vmul.f32 %v236, %v73
    %v238 = vmul.f32 %v227, %v49
    %v239 = vadd.f32 %v237, %v238
    %v240 = vmul.f32 %v234, %v51
    %v241 = vadd.f32 %v239, %v240
    %v242 = vmul.f32 %v241, %v45
    %v243 = vadd.f32 %v242, %v46
    %v244 = vmax.f32 %v243, 0.0
    %v245 = vmul.f32 %v244, %v47
    %v246 = vsel %vm93, %v245, 0.0
    %247 = vadd.xlane.f32.xlu0 %v246
    %v248 = vpop.xlane.xlu0 %247
    %v249 = vadd.f32 %v248, %v71
    %v250 = vmul.f32 %v236, %v75
    %v251 = vmul.f32 %v249, %v57
    %v252 = vadd.f32 %v250, %v251
    %v253 = vmul.f32 %v227, %v53
    %v254 = vadd.f32 %v252, %v253
    %v255 = vmul.f32 %v234, %v55
    %v256 = vadd.f32 %v254, %v255
    %vm257 = vcmp.eq.s32.totalorder %v81, 4
    %v258 = vsel %vm257, %v256, %v220
    %v259 = vmul.f32 %v236, %v77
    %v260 = vmul.f32 %v249, %v67
    %v261 = vadd.f32 %v259, %v260
    %v262 = vmul.f32 %v227, %v59
    %v263 = vadd.f32 %v261, %v262
    %v264 = vmul.f32 %v234, %v63
    %v265 = vadd.f32 %v263, %v264
    %v266 = vmul.f32 %v236, %v79
    %v267 = vmul.f32 %v249, %v69
    %v268 = vadd.f32 %v266, %v267
    %v269 = vmul.f32 %v227, %v61
    %v270 = vadd.f32 %v268, %v269
    %v271 = vmul.f32 %v234, %v65
    %v272 = vadd.f32 %v270, %v271
    %s273 = sld [smem:[#allocation2 + $0x5]]
    %v274 = vstv %s273
    %v275 = vmul.f32 %v274, %v73
    %v276 = vmul.f32 %v265, %v49
    %v277 = vadd.f32 %v275, %v276
    %v278 = vmul.f32 %v272, %v51
    %v279 = vadd.f32 %v277, %v278
    %v280 = vmul.f32 %v279, %v45
    %v281 = vadd.f32 %v280, %v46
    %v282 = vmax.f32 %v281, 0.0
    %v283 = vmul.f32 %v282, %v47
    %v284 = vsel %vm93, %v283, 0.0
    %285 = vadd.xlane.f32.xlu0 %v284
    %v286 = vpop.xlane.xlu0 %285
    %v287 = vadd.f32 %v286, %v71
    %v288 = vmul.f32 %v274, %v75
    %v289 = vmul.f32 %v287, %v57
    %v290 = vadd.f32 %v288, %v289
    %v291 = vmul.f32 %v265, %v53
    %v292 = vadd.f32 %v290, %v291
    %v293 = vmul.f32 %v272, %v55
    %v294 = vadd.f32 %v292, %v293
    %vm295 = vcmp.eq.s32.totalorder %v81, 5
    %v296 = vsel %vm295, %v294, %v258
    %v297 = vmul.f32 %v274, %v77
    %v298 = vmul.f32 %v287, %v67
    %v299 = vadd.f32 %v297, %v298
    %v300 = vmul.f32 %v265, %v59
    %v301 = vadd.f32 %v299, %v300
    %v302 = vmul.f32 %v272, %v63
    %v303 = vadd.f32 %v301, %v302
    %v304 = vmul.f32 %v274, %v79
    %v305 = vmul.f32 %v287, %v69
    %v306 = vadd.f32 %v304, %v305
    %v307 = vmul.f32 %v265, %v61
    %v308 = vadd.f32 %v306, %v307
    %v309 = vmul.f32 %v272, %v65
    %v310 = vadd.f32 %v308, %v309
    %s311 = sld [smem:[#allocation2 + $0x6]]
    %v312 = vstv %s311
    %v313 = vmul.f32 %v312, %v73
    %v314 = vmul.f32 %v303, %v49
    %v315 = vadd.f32 %v313, %v314
    %v316 = vmul.f32 %v310, %v51
    %v317 = vadd.f32 %v315, %v316
    %v318 = vmul.f32 %v317, %v45
    %v319 = vadd.f32 %v318, %v46
    %v320 = vmax.f32 %v319, 0.0
    %v321 = vmul.f32 %v320, %v47
    %v322 = vsel %vm93, %v321, 0.0
    %323 = vadd.xlane.f32.xlu0 %v322
    %v324 = vpop.xlane.xlu0 %323
    %v325 = vadd.f32 %v324, %v71
    %v326 = vmul.f32 %v312, %v75
    %v327 = vmul.f32 %v325, %v57
    %v328 = vadd.f32 %v326, %v327
    %v329 = vmul.f32 %v303, %v53
    %v330 = vadd.f32 %v328, %v329
    %v331 = vmul.f32 %v310, %v55
    %v332 = vadd.f32 %v330, %v331
    %vm333 = vcmp.eq.s32.totalorder %v81, 6
    %v334 = vsel %vm333, %v332, %v296
    %v335 = vmul.f32 %v312, %v77
    %v336 = vmul.f32 %v325, %v67
    %v337 = vadd.f32 %v335, %v336
    %v338 = vmul.f32 %v303, %v59
    %v339 = vadd.f32 %v337, %v338
    %v340 = vmul.f32 %v310, %v63
    %v341 = vadd.f32 %v339, %v340
    %v342 = vmul.f32 %v312, %v79
    %v343 = vmul.f32 %v325, %v69
    %v344 = vadd.f32 %v342, %v343
    %v345 = vmul.f32 %v303, %v61
    %v346 = vadd.f32 %v344, %v345
    %v347 = vmul.f32 %v310, %v65
    %v348 = vadd.f32 %v346, %v347
    %s349 = sld [smem:[#allocation2 + $0x7]]
    %v350 = vstv %s349
    %v351 = vmul.f32 %v350, %v73
    %v352 = vmul.f32 %v341, %v49
    %v353 = vadd.f32 %v351, %v352
    %v354 = vmul.f32 %v348, %v51
    %v355 = vadd.f32 %v353, %v354
    %v356 = vmul.f32 %v355, %v45
    %v357 = vadd.f32 %v356, %v46
    %v358 = vmax.f32 %v357, 0.0
    %v359 = vmul.f32 %v358, %v47
    %v360 = vsel %vm93, %v359, 0.0
    %361 = vadd.xlane.f32.xlu0 %v360
    %v362 = vpop.xlane.xlu0 %361
    %v363 = vadd.f32 %v362, %v71
    %v364 = vmul.f32 %v350, %v75
    %v365 = vmul.f32 %v363, %v57
    %v366 = vadd.f32 %v364, %v365
    %v367 = vmul.f32 %v341, %v53
    %v368 = vadd.f32 %v366, %v367
    %v369 = vmul.f32 %v348, %v55
    %v370 = vadd.f32 %v368, %v369
    %vm371 = vcmp.eq.s32.totalorder %v81, 7
    %v372 = vsel %vm371, %v370, %v334
    %373 = vst [vmem:[%s5] sm:$0x1] %v372
    // Predicated region
    $region30: #{hierarchical_rnn_lfr_forward.1} parent=1 // pred_check
      _
    $region31: #{hierarchical_rnn_lfr_forward.1} parent=1 // pred_check_branch
      %375 = sbr.rel (0) target = $region33
    $region32: #{hierarchical_rnn_lfr_forward.1} parent=1 // pred_region
      _
    $region33: #{hierarchical_rnn_lfr_forward.1} parent=1 // pred_fallthru
      _
    // Predicated region
    $region34: #{hierarchical_rnn_lfr_forward.1} parent=1 // pred_check
      _
    $region35: #{hierarchical_rnn_lfr_forward.1} parent=1 // pred_check_branch
      %377 = sbr.rel (0) target = $region37
    $region36: #{hierarchical_rnn_lfr_forward.1} parent=1 // pred_region
      _
    $region37: #{hierarchical_rnn_lfr_forward.1} parent=1 // pred_fallthru
      _
    %378 = vsyncpa [#allocation3], 1
    %379 = vsyncpa [#allocation5], 1

</llo_original>
